<compile_context>
chip_gen: v6e
topology: v6e:2x2x1
jax: 0.10.0
libtpu: 0.0.40
codegen_flags: <defaults>
</compile_context>

<pallas_src>
from functools import partial

import jax
import jax.numpy as jnp
import numpy as np
from jax.experimental import pallas as pl
from jax.experimental.pallas import tpu as pltpu  # noqa: F401  (TPU backend)

# ---------------- config (small, consistent with the module) ----------------
ENCODER_DIM = 32          # model_config.encoder_dim
FILTER_SIZE = 32          # model_config.feature_predictor_filter_size
KERNEL_SIZE = 3           # model_config.feature_predictor_kernel_size (padding=1 -> same length)
LN_EPS = 1e-5
B, T = 2, 8               # batch, sequence length


# ------------------------------ Pallas kernel -------------------------------
def _predictor_kernel(x_ref, w1_ref, w2_ref, pp_ref, out_ref, *, batch, seqlen):
    # x_ref:  (B*T, Cin)       flattened input
    # w*_ref: (3*Cin, F)       conv taps stacked along rows [k=-1; k=0; k=+1]
    # pp_ref: (8, F)           packed per-channel params:
    #                          rows = [b1, g1, bb1, b2, g2, bb2, lw^T, lb(broadcast)]
    # out_ref: (B, T)          lane-dense output
    bt = batch * seqlen
    x = x_ref[...].astype(jnp.float32)
    p = pp_ref[...]

    # Per-batch conv boundary masks (local time index within each batch element).
    row = jax.lax.broadcasted_iota(jnp.int32, (bt, 1), 0)
    local_t = row % seqlen
    is_first = local_t == 0                 # rows where x[t-1] must be zero padding
    is_last = local_t == (seqlen - 1)       # rows where x[t+1] must be zero padding

    def conv1d_k3(h, w_cat_ref):
        # h: (B*T, Cin) -> single fused matmul with K = 3*Cin.
        cin = h.shape[1]
        zero_row = jnp.zeros((1, cin), jnp.float32)
        hm1 = jnp.concatenate([zero_row, h[:-1, :]], axis=0)    # h[t-1] (global shift)
        hp1 = jnp.concatenate([h[1:, :], zero_row], axis=0)     # h[t+1] (global shift)
        hm1 = jnp.where(is_first, 0.0, hm1)                     # zero at batch starts
        hp1 = jnp.where(is_last, 0.0, hp1)                      # zero at batch ends
        hcat = jnp.concatenate([hm1, h, hp1], axis=-1)          # (B*T, 3*Cin)
        return jnp.dot(hcat, w_cat_ref[...], preferred_element_type=jnp.float32)

    def layernorm_relu(h, gamma, beta):
        m = jnp.mean(h, axis=-1, keepdims=True)
        d = h - m
        v = jnp.mean(d * d, axis=-1, keepdims=True)
        return jnp.maximum(d * jax.lax.rsqrt(v + LN_EPS) * gamma + beta, 0.0)

    h1 = layernorm_relu(conv1d_k3(x, w1_ref) + p[0:1, :], p[1:2, :], p[2:3, :])
    # Dropout: identity in eval mode.
    h2 = layernorm_relu(conv1d_k3(h1, w2_ref) + p[3:4, :], p[4:5, :], p[5:6, :])

    # Linear(F, 1): broadcast multiply + lane reduction -> lane-dense (B, T) output.
    prod = (h2 * p[6:7, :]).reshape(batch, seqlen, -1)          # (B, T, F)
    out = jnp.sum(prod, axis=-1) + p[7:8, 0:1]                  # (B, T) + scalar bias
    out_ref[...] = out.astype(out_ref.dtype)


# --------------------------------- wrapper -----------------------------------
@jax.jit
def base_feature_predictor(x, params):
    """x: (B, T, ENCODER_DIM) float32.  Returns (1, B, T) float32 (eval mode)."""
    (w1, b1, g1, bb1, w2, b2, g2, bb2, lw, lb) = params
    Bn, Tn, Cin = x.shape
    Fs = FILTER_SIZE

    x_flat = x.reshape(Bn * Tn, Cin)
    w1_cat = w1.reshape(KERNEL_SIZE * Cin, Fs)      # taps stacked along rows [k=0;k=1;k=2]
    w2_cat = w2.reshape(KERNEL_SIZE * Fs, Fs)
    packed = jnp.concatenate(
        [b1, g1, bb1, b2, g2, bb2, lw.reshape(1, Fs), jnp.broadcast_to(lb, (1, Fs))],
        axis=0,
    ).astype(jnp.float32)                            # (8, Fs)

    out = pl.pallas_call(
        partial(_predictor_kernel, batch=Bn, seqlen=Tn),
        out_shape=jax.ShapeDtypeStruct((Bn, Tn), jnp.float32),
    )(x_flat, w1_cat, w2_cat, packed)

    # (B, T) -> eval-mode unsqueeze(0) -> (1, B, T)
    return out[None]


# --------------------------- pure-JAX reference ------------------------------
def reference(x, params):
    (w1, b1, g1, bb1, w2, b2, g2, bb2, lw, lb) = params

    def conv(h, w, b):
        hp = jnp.pad(h, ((0, 0), (1, 1), (0, 0)))
        return (jnp.einsum("btc,cf->btf", hp[:, :-2], w[0]) +
                jnp.einsum("btc,cf->btf", hp[:, 1:-1], w[1]) +
                jnp.einsum("btc,cf->btf", hp[:, 2:], w[2]) + b)

    def ln_relu(h, g, bb):
        m = jnp.mean(h, axis=-1, keepdims=True)
        v = jnp.mean((h - m) ** 2, axis=-1, keepdims=True)
        return jnp.maximum((h - m) / jnp.sqrt(v + LN_EPS) * g + bb, 0.0)

    h1 = ln_relu(conv(x, w1, b1), g1, bb1)
    h2 = ln_relu(conv(h1, w2, b2), g2, bb2)
    out = jnp.einsum("btf,fo->bto", h2, lw) + lb
    return out[..., 0][None]


# -------------------------------- main ---------------------------------------
if __name__ == "__main__":
    key = jax.random.PRNGKey(0)
    ks = jax.random.split(key, 12)

    # Deterministic synthetic parameters (PyTorch Conv1d weight is (Cout, Cin, K);
    # we store the equivalent (K, Cin, Cout) used by the shifted-matmul formulation).
    w1 = jax.random.normal(ks[0], (KERNEL_SIZE, ENCODER_DIM, FILTER_SIZE), jnp.float32) * 0.1
    b1 = jax.random.normal(ks[1], (1, FILTER_SIZE), jnp.float32) * 0.1
    g1 = 1.0 + 0.1 * jax.random.normal(ks[7], (1, FILTER_SIZE), jnp.float32)
    bb1 = 0.1 * jax.random.normal(ks[8], (1, FILTER_SIZE), jnp.float32)
    w2 = jax.random.normal(ks[2], (KERNEL_SIZE, FILTER_SIZE, FILTER_SIZE), jnp.float32) * 0.1
    b2 = jax.random.normal(ks[3], (1, FILTER_SIZE), jnp.float32) * 0.1
    g2 = 1.0 + 0.1 * jax.random.normal(ks[9], (1, FILTER_SIZE), jnp.float32)
    bb2 = 0.1 * jax.random.normal(ks[10], (1, FILTER_SIZE), jnp.float32)
    lw = jax.random.normal(ks[4], (FILTER_SIZE, 1), jnp.float32) * 0.1
    lb = jax.random.normal(ks[5], (1, 1), jnp.float32) * 0.1
    params = (w1, b1, g1, bb1, w2, b2, g2, bb2, lw, lb)

    x = jax.random.normal(ks[6], (B, T, ENCODER_DIM), jnp.float32)

    out = jax.block_until_ready(base_feature_predictor(x, params))
    ref = jax.block_until_ready(reference(x, params))

    assert out.shape == (1, B, T), out.shape
    np.testing.assert_allclose(np.asarray(out), np.asarray(ref), rtol=1e-4, atol=1e-4)
    print("KERNEL_OK")
</pallas_src>

<mosaic_0001>
module attributes {stable_mosaic.version = 11 : i64} {
  func.func @_predictor_kernel(%arg0: memref<16x32xf32, #tpu.memory_space<vmem>>, %arg1: memref<96x32xf32, #tpu.memory_space<vmem>>, %arg2: memref<96x32xf32, #tpu.memory_space<vmem>>, %arg3: memref<8x32xf32, #tpu.memory_space<vmem>>, %arg4: memref<2x8xf32, #tpu.memory_space<vmem>>) attributes {dimension_semantics = [], scalar_prefetch = 0 : i64, scratch_operands = 0 : i64, tpu.core_type = #tpu.core_type<tc>} {
    %c0 = arith.constant 0 : index
    %c0_0 = arith.constant 0 : index
    %0 = vector.load %arg0[%c0, %c0_0] : memref<16x32xf32, #tpu.memory_space<vmem>>, vector<16x32xf32>
    %c0_1 = arith.constant 0 : index
    %c0_2 = arith.constant 0 : index
    %1 = vector.load %arg3[%c0_1, %c0_2] : memref<8x32xf32, #tpu.memory_space<vmem>>, vector<8x32xf32>
    %2 = tpu.iota {dimensions = array<i32: 0>} : vector<16x1xi32>
    %c8_i32 = arith.constant 8 : i32
    %c0_i32 = arith.constant 0 : i32
    %3 = arith.cmpi eq, %c8_i32, %c0_i32 : i32
    %c1_i32 = arith.constant 1 : i32
    %4 = arith.select %3, %c1_i32, %c8_i32 : i32
    %5 = vector.broadcast %4 : i32 to vector<16x1xi32>
    %6 = arith.remsi %2, %5 : vector<16x1xi32>
    %c0_i32_3 = arith.constant 0 : i32
    %7 = vector.broadcast %c0_i32_3 : i32 to vector<16x1xi32>
    %8 = arith.cmpi ne, %6, %7 : vector<16x1xi32>
    %c0_i32_4 = arith.constant 0 : i32
    %9 = vector.broadcast %c0_i32_4 : i32 to vector<16x1xi32>
    %10 = arith.cmpi slt, %6, %9 : vector<16x1xi32>
    %c0_i32_5 = arith.constant 0 : i32
    %11 = arith.cmpi slt, %4, %c0_i32_5 : i32
    %12 = vector.broadcast %11 : i1 to vector<16x1xi1>
    %13 = vector.broadcast %12 : vector<16x1xi1> to vector<16x1xi1>
    %14 = arith.xori %10, %13 : vector<16x1xi1>
    %15 = arith.andi %14, %8 : vector<16x1xi1>
    %16 = vector.broadcast %4 : i32 to vector<16x1xi32>
    %17 = arith.addi %6, %16 : vector<16x1xi32>
    %18 = arith.select %15, %17, %6 : vector<16x1xi1>, vector<16x1xi32>
    %c0_i32_6 = arith.constant 0 : i32
    %19 = vector.broadcast %c0_i32_6 : i32 to vector<16x1xi32>
    %20 = arith.cmpi eq, %18, %19 : vector<16x1xi32>
    %c7_i32 = arith.constant 7 : i32
    %21 = vector.broadcast %c7_i32 : i32 to vector<16x1xi32>
    %22 = arith.cmpi eq, %18, %21 : vector<16x1xi32>
    %cst = arith.constant 0.000000e+00 : f32
    %23 = vector.broadcast %cst : f32 to vector<1x32xf32>
    %24 = vector.extract_strided_slice %0 {offsets = [0, 0], sizes = [15, 32], strides = [1, 1]} : vector<16x32xf32> to vector<15x32xf32>
    %25 = tpu.concatenate %23, %24 in 0 : vector<1x32xf32>, vector<15x32xf32> -> vector<16x32xf32>
    %26 = vector.extract_strided_slice %0 {offsets = [1, 0], sizes = [15, 32], strides = [1, 1]} : vector<16x32xf32> to vector<15x32xf32>
    %27 = tpu.concatenate %26, %23 in 0 : vector<15x32xf32>, vector<1x32xf32> -> vector<16x32xf32>
    %cst_7 = arith.constant 0.000000e+00 : f32
    %28 = vector.shape_cast %20 : vector<16x1xi1> to vector<16x1xi1>
    %29 = vector.broadcast %28 : vector<16x1xi1> to vector<16x32xi1>
    %30 = vector.broadcast %cst_7 : f32 to vector<16x32xf32>
    %31 = arith.select %29, %30, %25 : vector<16x32xi1>, vector<16x32xf32>
    %cst_8 = arith.constant 0.000000e+00 : f32
    %32 = vector.shape_cast %22 : vector<16x1xi1> to vector<16x1xi1>
    %33 = vector.broadcast %32 : vector<16x1xi1> to vector<16x32xi1>
    %34 = vector.broadcast %cst_8 : f32 to vector<16x32xf32>
    %35 = arith.select %33, %34, %27 : vector<16x32xi1>, vector<16x32xf32>
    %36 = tpu.concatenate %31, %0, %35 in 1 : vector<16x32xf32>, vector<16x32xf32>, vector<16x32xf32> -> vector<16x96xf32>
    %c0_9 = arith.constant 0 : index
    %c0_10 = arith.constant 0 : index
    %37 = vector.load %arg1[%c0_9, %c0_10] : memref<96x32xf32, #tpu.memory_space<vmem>>, vector<96x32xf32>
    %cst_11 = arith.constant dense<0.000000e+00> : vector<16x32xf32>
    %38 = tpu.matmul %36, %37, %cst_11 {dimension_numbers = #tpu.dot_dimension_numbers<[1], [0], [0], [1], [0, 0, 1, 1], [], []>} : vector<16x96xf32>, vector<96x32xf32>, vector<16x32xf32> -> vector<16x32xf32>
    %39 = vector.extract_strided_slice %1 {offsets = [0, 0], sizes = [1, 32], strides = [1, 1]} : vector<8x32xf32> to vector<1x32xf32>
    %40 = vector.broadcast %39 : vector<1x32xf32> to vector<16x32xf32>
    %41 = arith.addf %38, %40 : vector<16x32xf32>
    %42 = vector.extract_strided_slice %1 {offsets = [1, 0], sizes = [1, 32], strides = [1, 1]} : vector<8x32xf32> to vector<1x32xf32>
    %43 = vector.extract_strided_slice %1 {offsets = [2, 0], sizes = [1, 32], strides = [1, 1]} : vector<8x32xf32> to vector<1x32xf32>
    %cst_12 = arith.constant dense<0.000000e+00> : vector<16xf32>
    %44 = vector.multi_reduction <add>, %41, %cst_12 [1] : vector<16x32xf32> to vector<16xf32>
    %45 = vector.shape_cast %44 : vector<16xf32> to vector<16x1xf32>
    %cst_13 = arith.constant 3.200000e+01 : f32
    %46 = vector.broadcast %cst_13 : f32 to vector<16x1xf32>
    %47 = arith.divf %45, %46 : vector<16x1xf32>
    %48 = vector.broadcast %47 : vector<16x1xf32> to vector<16x32xf32>
    %49 = arith.subf %41, %48 : vector<16x32xf32>
    %50 = arith.mulf %49, %49 : vector<16x32xf32>
    %cst_14 = arith.constant dense<0.000000e+00> : vector<16xf32>
    %51 = vector.multi_reduction <add>, %50, %cst_14 [1] : vector<16x32xf32> to vector<16xf32>
    %52 = vector.shape_cast %51 : vector<16xf32> to vector<16x1xf32>
    %cst_15 = arith.constant 3.200000e+01 : f32
    %53 = vector.broadcast %cst_15 : f32 to vector<16x1xf32>
    %54 = arith.divf %52, %53 : vector<16x1xf32>
    %cst_16 = arith.constant 9.99999974E-6 : f32
    %55 = vector.broadcast %cst_16 : f32 to vector<16x1xf32>
    %56 = arith.addf %54, %55 : vector<16x1xf32>
    %57 = math.rsqrt %56 : vector<16x1xf32>
    %58 = vector.broadcast %57 : vector<16x1xf32> to vector<16x32xf32>
    %59 = arith.mulf %49, %58 : vector<16x32xf32>
    %60 = vector.broadcast %42 : vector<1x32xf32> to vector<16x32xf32>
    %61 = arith.mulf %59, %60 : vector<16x32xf32>
    %62 = vector.broadcast %43 : vector<1x32xf32> to vector<16x32xf32>
    %63 = arith.addf %61, %62 : vector<16x32xf32>
    %cst_17 = arith.constant 0.000000e+00 : f32
    %64 = vector.broadcast %cst_17 : f32 to vector<16x32xf32>
    %65 = arith.maximumf %63, %64 : vector<16x32xf32>
    %cst_18 = arith.constant 0.000000e+00 : f32
    %66 = vector.broadcast %cst_18 : f32 to vector<1x32xf32>
    %67 = vector.extract_strided_slice %65 {offsets = [0, 0], sizes = [15, 32], strides = [1, 1]} : vector<16x32xf32> to vector<15x32xf32>
    %68 = tpu.concatenate %66, %67 in 0 : vector<1x32xf32>, vector<15x32xf32> -> vector<16x32xf32>
    %69 = vector.extract_strided_slice %65 {offsets = [1, 0], sizes = [15, 32], strides = [1, 1]} : vector<16x32xf32> to vector<15x32xf32>
    %70 = tpu.concatenate %69, %66 in 0 : vector<15x32xf32>, vector<1x32xf32> -> vector<16x32xf32>
    %cst_19 = arith.constant 0.000000e+00 : f32
    %71 = vector.shape_cast %20 : vector<16x1xi1> to vector<16x1xi1>
    %72 = vector.broadcast %71 : vector<16x1xi1> to vector<16x32xi1>
    %73 = vector.broadcast %cst_19 : f32 to vector<16x32xf32>
    %74 = arith.select %72, %73, %68 : vector<16x32xi1>, vector<16x32xf32>
    %cst_20 = arith.constant 0.000000e+00 : f32
    %75 = vector.shape_cast %22 : vector<16x1xi1> to vector<16x1xi1>
    %76 = vector.broadcast %75 : vector<16x1xi1> to vector<16x32xi1>
    %77 = vector.broadcast %cst_20 : f32 to vector<16x32xf32>
    %78 = arith.select %76, %77, %70 : vector<16x32xi1>, vector<16x32xf32>
    %79 = tpu.concatenate %74, %65, %78 in 1 : vector<16x32xf32>, vector<16x32xf32>, vector<16x32xf32> -> vector<16x96xf32>
    %c0_21 = arith.constant 0 : index
    %c0_22 = arith.constant 0 : index
    %80 = vector.load %arg2[%c0_21, %c0_22] : memref<96x32xf32, #tpu.memory_space<vmem>>, vector<96x32xf32>
    %cst_23 = arith.constant dense<0.000000e+00> : vector<16x32xf32>
    %81 = tpu.matmul %79, %80, %cst_23 {dimension_numbers = #tpu.dot_dimension_numbers<[1], [0], [0], [1], [0, 0, 1, 1], [], []>} : vector<16x96xf32>, vector<96x32xf32>, vector<16x32xf32> -> vector<16x32xf32>
    %82 = vector.extract_strided_slice %1 {offsets = [3, 0], sizes = [1, 32], strides = [1, 1]} : vector<8x32xf32> to vector<1x32xf32>
    %83 = vector.broadcast %82 : vector<1x32xf32> to vector<16x32xf32>
    %84 = arith.addf %81, %83 : vector<16x32xf32>
    %85 = vector.extract_strided_slice %1 {offsets = [4, 0], sizes = [1, 32], strides = [1, 1]} : vector<8x32xf32> to vector<1x32xf32>
    %86 = vector.extract_strided_slice %1 {offsets = [5, 0], sizes = [1, 32], strides = [1, 1]} : vector<8x32xf32> to vector<1x32xf32>
    %cst_24 = arith.constant dense<0.000000e+00> : vector<16xf32>
    %87 = vector.multi_reduction <add>, %84, %cst_24 [1] : vector<16x32xf32> to vector<16xf32>
    %88 = vector.shape_cast %87 : vector<16xf32> to vector<16x1xf32>
    %cst_25 = arith.constant 3.200000e+01 : f32
    %89 = vector.broadcast %cst_25 : f32 to vector<16x1xf32>
    %90 = arith.divf %88, %89 : vector<16x1xf32>
    %91 = vector.broadcast %90 : vector<16x1xf32> to vector<16x32xf32>
    %92 = arith.subf %84, %91 : vector<16x32xf32>
    %93 = arith.mulf %92, %92 : vector<16x32xf32>
    %cst_26 = arith.constant dense<0.000000e+00> : vector<16xf32>
    %94 = vector.multi_reduction <add>, %93, %cst_26 [1] : vector<16x32xf32> to vector<16xf32>
    %95 = vector.shape_cast %94 : vector<16xf32> to vector<16x1xf32>
    %cst_27 = arith.constant 3.200000e+01 : f32
    %96 = vector.broadcast %cst_27 : f32 to vector<16x1xf32>
    %97 = arith.divf %95, %96 : vector<16x1xf32>
    %cst_28 = arith.constant 9.99999974E-6 : f32
    %98 = vector.broadcast %cst_28 : f32 to vector<16x1xf32>
    %99 = arith.addf %97, %98 : vector<16x1xf32>
    %100 = math.rsqrt %99 : vector<16x1xf32>
    %101 = vector.broadcast %100 : vector<16x1xf32> to vector<16x32xf32>
    %102 = arith.mulf %92, %101 : vector<16x32xf32>
    %103 = vector.broadcast %85 : vector<1x32xf32> to vector<16x32xf32>
    %104 = arith.mulf %102, %103 : vector<16x32xf32>
    %105 = vector.broadcast %86 : vector<1x32xf32> to vector<16x32xf32>
    %106 = arith.addf %104, %105 : vector<16x32xf32>
    %cst_29 = arith.constant 0.000000e+00 : f32
    %107 = vector.broadcast %cst_29 : f32 to vector<16x32xf32>
    %108 = arith.maximumf %106, %107 : vector<16x32xf32>
    %109 = vector.extract_strided_slice %1 {offsets = [6, 0], sizes = [1, 32], strides = [1, 1]} : vector<8x32xf32> to vector<1x32xf32>
    %110 = vector.broadcast %109 : vector<1x32xf32> to vector<16x32xf32>
    %111 = arith.mulf %108, %110 : vector<16x32xf32>
    %112 = vector.shape_cast %111 : vector<16x32xf32> to vector<2x8x32xf32>
    %cst_30 = arith.constant dense<0.000000e+00> : vector<2x8xf32>
    %113 = vector.multi_reduction <add>, %112, %cst_30 [2] : vector<2x8x32xf32> to vector<2x8xf32>
    %114 = vector.extract_strided_slice %1 {offsets = [7, 0], sizes = [1, 1], strides = [1, 1]} : vector<8x32xf32> to vector<1x1xf32>
    %115 = vector.broadcast %114 : vector<1x1xf32> to vector<2x8xf32>
    %116 = arith.addf %113, %115 : vector<2x8xf32>
    %c0_31 = arith.constant 0 : index
    %c0_32 = arith.constant 0 : index
    %117 = vector.load %arg4[%c0_31, %c0_32] : memref<2x8xf32, #tpu.memory_space<vmem>>, vector<2x8xf32>
    tpu.vector_store %arg4[%c0_31, %c0_32], %116 {strides = array<i32>} : memref<2x8xf32, #tpu.memory_space<vmem>>, vector<2x8xf32>,
    return
  }
}

</mosaic_0001>

<llo_original>
// kernel: base_feature_predictor.1
$region0: #{base_feature_predictor.1}
  #allocation0 [shape = 'u32[]', space=smem, size = 0x4, offset = 0x4, fixed_abs, tag = 'smem constant byte address 0x4 - core index']
  #allocation1 [shape = 'u32[144,128]{1,0:T(1,128)}', space=vmem, size = 0x12000, scoped, tag = 'internal scratch']
  %s0 = inlined_call_operand.vmem [shape: f32[16,32], index: 0, kind: input, shape index: {}]
  %s1 = inlined_call_operand.hbm [shape: f32[96,32], index: 1, kind: input, shape index: {}]
  %s2 = inlined_call_operand.hbm [shape: f32[96,32], index: 2, kind: input, shape index: {}]
  %s3 = inlined_call_operand.vmem [shape: f32[8,32], index: 3, kind: input, shape index: {}]
  %s4 = inlined_call_operand.hbm [shape: f32[2,8], index: 4, kind: output, shape index: {}]
  %s5 = sld [smem:[#allocation0]]
  $region34: #{base_feature_predictor.1} parent=0
    _
  %s7 = ssub.s32 1, %s5
  %s8 = scalar_select 0, %s7, %s5
  $region1: #{base_feature_predictor.1} parent=0
    #allocation2 [shape = 'u8[49152]{0}', space=vmem, size = 0xc000, scoped, tag = 'input window, operand 1, single buffered']
    #allocation3 [shape = 's32[1]{0}', space=sflag, size = 0x4, scoped, tag = 'scoped memory for base_feature_predictor.1']
    #allocation4 [shape = 's32[1]{0}', space=sflag, size = 0x4, scoped, tag = 'scoped memory for base_feature_predictor.1']
    #allocation5 [shape = 'u8[49152]{0}', space=vmem, size = 0xc000, scoped, tag = 'input window, operand 2, single buffered']
    #allocation6 [shape = 's32[1]{0}', space=sflag, size = 0x4, scoped, tag = 'scoped memory for base_feature_predictor.1']
    #allocation7 [shape = 'u8[1024]{0}', space=vmem, size = 0x400, scoped, tag = 'output window, operand 0, single buffered']
    %9 = vsyncpa [#allocation3], 0
    %10 = vsyncpa [#allocation6], 0
    %11 = vsyncpa [#allocation4], 0
    // Predicated region
    $region2: #{base_feature_predictor.1} parent=1 // pred_check
      _
    $region3: #{base_feature_predictor.1} parent=1 // pred_check_branch
      %13 = sbr.rel (0) target = $region5
    $region4: #{base_feature_predictor.1} parent=1 // pred_region
      _
    $region5: #{base_feature_predictor.1} parent=1 // pred_fallthru
      _
    // Predicated region
    $region6: #{base_feature_predictor.1} parent=1 // pred_check
      _
    $region7: #{base_feature_predictor.1} parent=1 // pred_check_branch
      %15 = sbr.rel (0) target = $region9
    $region8: #{base_feature_predictor.1} parent=1 // pred_region
      %s17 = ssub.s32 1536, 1536
      %18 = vsyncadd [#allocation3], %s17
      %s19 = sshll.u32 [#allocation2], 4
      %s20 = int_to_ptr.vmem [resolvable:$true] %s19
      %25 = dma.hbm_to_vmem [thread:$0]  %s1, 1536, %s20, [#allocation3], 128, 128, 8
    $region9: #{base_feature_predictor.1} parent=1 // pred_fallthru
      _
    // Predicated region
    $region10: #{base_feature_predictor.1} parent=1 // pred_check
      _
    $region11: #{base_feature_predictor.1} parent=1 // pred_check_branch
      %27 = sbr.rel (0) target = $region13
    $region12: #{base_feature_predictor.1} parent=1 // pred_region
      %s29 = ssub.s32 1536, 1536
      %30 = vsyncadd [#allocation6], %s29
      %s31 = sshll.u32 [#allocation5], 4
      %s32 = int_to_ptr.vmem [resolvable:$true] %s31
      %37 = dma.hbm_to_vmem [thread:$0]  %s2, 1536, %s32, [#allocation6], 128, 128, 8
    $region13: #{base_feature_predictor.1} parent=1 // pred_fallthru
      _
    // Predicated region
    $region14: #{base_feature_predictor.1} parent=1 // pred_check
      _
    $region15: #{base_feature_predictor.1} parent=1 // pred_check_branch
      %39 = sbr.rel (0) target = $region17
    $region16: #{base_feature_predictor.1} parent=1 // pred_region
      _
    $region17: #{base_feature_predictor.1} parent=1 // pred_fallthru
      _
    // Predicated region
    $region18: #{base_feature_predictor.1} parent=1 // pred_check
      _
    $region19: #{base_feature_predictor.1} parent=1 // pred_check_branch
      %41 = sbr.rel (0) target = $region21
    $region20: #{base_feature_predictor.1} parent=1 // pred_region
      %42 = dma.done [#allocation3], 1536
    $region21: #{base_feature_predictor.1} parent=1 // pred_fallthru
      _
    // Predicated region
    $region22: #{base_feature_predictor.1} parent=1 // pred_check
      _
    $region23: #{base_feature_predictor.1} parent=1 // pred_check_branch
      %44 = sbr.rel (0) target = $region25
    $region24: #{base_feature_predictor.1} parent=1 // pred_region
      %45 = dma.done [#allocation6], 1536
    $region25: #{base_feature_predictor.1} parent=1 // pred_fallthru
      _
    %v46 = vld [vmem:[%s0] sm:$0xff]
    %v47 = vld [vmem:[%s0 + $0x8] sm:$0xff]
    %v48 = vld [vmem:[%s3] sm:$0xff]
    %v49 = vlaneseq
    %v50 = vshrl.u32 %v49, 7
    %v51 = vadd.s32 %v50, 8
    %vm52 = vcmp.lt.s32.totalorder %v50, 0
    %v53 = vsub.s32 0, %v50
    %v54 = vsel %vm52, %v53, %v50
    %v55 = vshrl.u32 %v54, 3
    %v56 = vand.u32 %v54, 7
    %v57 = vsub.s32 0, %v56
    %v58 = vsel %vm52, %v57, %v56
    %vm59 = vcmp.lt.s32.totalorder %v51, 0
    %v60 = vsub.s32 0, %v51
    %v61 = vsel %vm59, %v60, %v51
    %v62 = vshrl.u32 %v61, 3
    %v63 = vand.u32 %v61, 7
    %v64 = vsub.s32 0, %v63
    %v65 = vsel %vm59, %v64, %v63
    %vm66 = vcmp.ne.s32.totalorder %v58, 0
    %vm67 = vcmp.ne.s32.totalorder %v65, 0
    %vm68 = vcmp.lt.s32.totalorder %v58, 0
    %vm69 = vcmp.lt.s32.totalorder %v65, 0
    %vm70 = vmand %vm68, %vm66
    %vm71 = vmand %vm69, %vm67
    %v72 = vadd.s32 %v58, 8
    %v73 = vadd.s32 %v65, 8
    %v74 = vsel %vm70, %v72, %v58
    %v75 = vsel %vm71, %v73, %v65
    %vm76 = vcmp.eq.s32.totalorder %v74, 0
    %vm77 = vcmp.eq.s32.totalorder %v75, 0
    %vm78 = vcmp.eq.s32.totalorder %v74, 7
    %vm79 = vcmp.eq.s32.totalorder %v75, 7
    %vm82 = vcmask 1040384
    %v83 = vrot.slane %v46, 7
    %v84 = vrot.slane %v47, 7
    %v85 = vsel %vm82, %v83, %v84
    %v88 = vsel %vm82, 0.0, %v83
    %vm89 = vcmask 1046528
    %v90 = vrot.slane %v46, 1
    %v91 = vrot.slane %v47, 1
    %v92 = vsel %vm89, %v90, %v91
    %v95 = vsel %vm89, %v91, 0.0
    %v96 = vsel %vm76, 1, 0
    %v97 = vsel %vm77, 1, 0
    %vm98 = vcmp.eq.s32.totalorder %v96, 1
    %vm99 = vcmp.eq.s32.totalorder %v97, 1
    %v100 = vsel %vm98, 0.0, %v88
    %v101 = vsel %vm99, 0.0, %v85
    %v102 = vsel %vm78, 1, 0
    %v103 = vsel %vm79, 1, 0
    %vm104 = vcmp.eq.s32.totalorder %v102, 1
    %vm105 = vcmp.eq.s32.totalorder %v103, 1
    %v106 = vsel %vm104, 0.0, %v92
    %v107 = vsel %vm105, 0.0, %v95
    %108 = vrot.lane.b32.xlu0 %v46, 32
    %v109 = vpop.permute.xlu0 %108
    %110 = vrot.lane.b32.xlu0 %v47, 32
    %v111 = vpop.permute.xlu0 %110
    %116 = vrot.lane.b32.xlu0 %v106, 64
    %v117 = vpop.permute.xlu0 %116
    %118 = vrot.lane.b32.xlu0 %v107, 64
    %v119 = vpop.permute.xlu0 %118
    %vm122 = vcmask 261120
    %v123 = vsel %vm122, %v100, %v109
    %v124 = vsel %vm122, %v101, %v111
    %vm125 = vcmask 523264
    %v126 = vsel %vm125, %v123, %v117
    %v127 = vsel %vm125, %v124, %v119
    %v128 = vld [vmem:[#allocation2] sm:$0xff]
    %v129 = vld [vmem:[#allocation2 + $0x8] sm:$0xff]
    %v130 = vld [vmem:[#allocation2 + $0x10] sm:$0xff]
    %v131 = vld [vmem:[#allocation2 + $0x18] sm:$0xff]
    %v132 = vld [vmem:[#allocation2 + $0x20] sm:$0xff]
    %v133 = vld [vmem:[#allocation2 + $0x28] sm:$0xff]
    %v134 = vld [vmem:[#allocation2 + $0x30] sm:$0xff]
    %v135 = vld [vmem:[#allocation2 + $0x38] sm:$0xff]
    %v136 = vld [vmem:[#allocation2 + $0x40] sm:$0xff]
    %v137 = vld [vmem:[#allocation2 + $0x48] sm:$0xff]
    %v138 = vld [vmem:[#allocation2 + $0x50] sm:$0xff]
    %v139 = vld [vmem:[#allocation2 + $0x58] sm:$0xff]
    %v140 = vlaneseq
    %v141 = vshrl.u32 %v140, 7
    %v142 = vsub.s32 0, %v141
    %v143 = vrot.slane %v48, %v142
    %vm144 = vcmask 785408
    %v146 = vsel %vm144, %v126, 0
    %v149 = vsel %vm144, %v127, 0
    %151 = vmatprep.subr.mxu0 0.0
    %152 = vmatpush1.msra.mxu0 0.0
    %153 = vmatprep.subr.mxu0 0.0
    %154 = vmatpush1.msra.mxu0 0.0
    %155 = vmatprep.subr.mxu0 0.0
    %156 = vmatpush1.msra.mxu0 0.0
    %157 = vmatprep.subr.mxu0 0.0
    %158 = vmatpush1.msra.mxu0 0.0
    %159 = vmatprep.subr.mxu0 0.0
    %160 = vmatpush1.msra.mxu0 %v139
    %161 = vmatprep.subr.mxu0 0.0
    %162 = vmatpush1.msra.mxu0 %v138
    %163 = vmatprep.subr.mxu0 0.0
    %164 = vmatpush1.msra.mxu0 %v137
    %165 = vmatprep.subr.mxu0 0.0
    %166 = vmatpush1.msra.mxu0 %v136
    %167 = vmatprep.subr.mxu0 0.0
    %168 = vmatpush1.msra.mxu0 %v135
    %169 = vmatprep.subr.mxu0 0.0
    %170 = vmatpush1.msra.mxu0 %v134
    %171 = vmatprep.subr.mxu0 0.0
    %172 = vmatpush1.msra.mxu0 %v133
    %173 = vmatprep.subr.mxu0 0.0
    %174 = vmatpush1.msra.mxu0 %v132
    %175 = vmatprep.subr.mxu0 0.0
    %176 = vmatpush1.msra.mxu0 %v131
    %177 = vmatprep.subr.mxu0 0.0
    %178 = vmatpush1.msra.mxu0 %v130
    %179 = vmatprep.subr.mxu0 0.0
    %180 = vmatpush1.msra.mxu0 %v129
    %181 = vmatprep.subr.mxu0 0.0
    %182 = vmatpush1.msra.mxu0 %v128
    %183 = vmatprep.subr.mxu0 0.0
    %184 = vmatpush2.msra.mxu0 0.0
    %185 = vmatprep.subr.mxu0 0.0
    %186 = vmatpush2.msra.mxu0 0.0
    %187 = vmatprep.subr.mxu0 0.0
    %188 = vmatpush2.msra.mxu0 0.0
    %189 = vmatprep.subr.mxu0 0.0
    %190 = vmatpush2.msra.mxu0 0.0
    %191 = vmatprep.subr.mxu0 0.0
    %192 = vmatpush2.msra.mxu0 0.0
    %193 = vmatprep.subr.mxu0 0.0
    %194 = vmatpush2.msra.mxu0 0.0
    %195 = vmatprep.subr.mxu0 0.0
    %196 = vmatpush2.msra.mxu0 0.0
    %197 = vmatprep.subr.mxu0 0.0
    %198 = vmatpush2.msra.mxu0 0.0
    %199 = vmatprep.subr.mxu0 0.0
    %200 = vmatpush2.msra.mxu0 0.0
    %201 = vmatprep.subr.mxu0 0.0
    %202 = vmatpush2.msra.mxu0 0.0
    %203 = vmatprep.subr.mxu0 0.0
    %204 = vmatpush2.msra.mxu0 0.0
    %205 = vmatprep.subr.mxu0 0.0
    %206 = vmatpush2.msra.mxu0 0.0
    %207 = vmatprep.subr.mxu0 0.0
    %208 = vmatpush2.msra.mxu0 0.0
    %209 = vmatprep.subr.mxu0 0.0
    %210 = vmatpush2.msra.mxu0 0.0
    %211 = vmatprep.subr.mxu0 0.0
    %212 = vmatpush2.msra.mxu0 0.0
    %213 = vmatprep.subr.mxu0 0.0
    %214 = vmatpush2.msra.mxu0 0.0
    %215 = vmatprep.mubr.f32.mxu0 0.0
    %216 = vmatmul.mubr.f32.gmra.mxu0 %v146
    %v217 = vpop.f32.mrf.mxu0
    %v218 = vadd.f32 %v143, %v217
    %v219 = vpop.f32.mrf.mxu0
    %220 = vmatprep.mubr.f32.mxu0 0.0
    %221 = vmatmul.mubr.f32.gmra.mxu0 %v149
    %v222 = vpop.f32.mrf.mxu0
    %v223 = vadd.f32 %v143, %v222
    %v224 = vpop.f32.mrf.mxu0
    %225 = vdwg.mxu0
    %v226 = vsel %vm122, %v218, 0.0
    %227 = vadd.xlane.f32.xlu0 %v226
    %v228 = vpop.xlane.xlu0 %227
    %v229 = vsel %vm122, %v223, 0.0
    %230 = vadd.xlane.f32.xlu0 %v229
    %v231 = vpop.xlane.xlu0 %230
    %v232 = vrcp.pop 32.0
    %v233 = vmul.f32 %v228, %v232
    %v234 = vmul.f32 %v231, %v232
    %v235 = vsub.f32 %v218, %v233
    %v236 = vsub.f32 %v223, %v234
    %v237 = vmul.f32 %v235, %v235
    %v238 = vmul.f32 %v236, %v236
    %v239 = vsel %vm122, %v237, 0.0
    %240 = vadd.xlane.f32.xlu0 %v239
    %v241 = vpop.xlane.xlu0 %240
    %v242 = vsel %vm122, %v238, 0.0
    %243 = vadd.xlane.f32.xlu0 %v242
    %v244 = vpop.xlane.xlu0 %243
    %v245 = vmul.f32 %v241, %v232
    %v246 = vmul.f32 %v244, %v232
    %v247 = vadd.f32 %v245, 1e-05
    %v248 = vadd.f32 %v246, 1e-05
    %v249 = vrsqrt.pop %v247
    %v250 = vrsqrt.pop %v248
    %v251 = vmul.f32 %v235, %v249
    %v252 = vmul.f32 %v236, %v250
    %v253 = vlaneseq
    %v254 = vshrl.u32 %v253, 7
    %v255 = vsub.s32 1, %v254
    %v256 = vrot.slane %v48, %v255
    %v257 = vmul.f32 %v251, %v256
    %v258 = vmul.f32 %v252, %v256
    %v259 = vlaneseq
    %v260 = vshrl.u32 %v259, 7
    %v261 = vsub.s32 2, %v260
    %v262 = vrot.slane %v48, %v261
    %v263 = vadd.f32 %v257, %v262
    %v264 = vadd.f32 %v258, %v262
    %v265 = vmax.f32 %v263, 0.0
    %v266 = vmax.f32 %v264, 0.0
    %v269 = vrot.slane %v265, 7
    %v270 = vrot.slane %v266, 7
    %v271 = vsel %vm82, %v269, %v270
    %v274 = vsel %vm82, 0.0, %v269
    %v275 = vrot.slane %v265, 1
    %v276 = vrot.slane %v266, 1
    %v277 = vsel %vm89, %v275, %v276
    %v280 = vsel %vm89, %v276, 0.0
    %v281 = vsel %vm98, 0.0, %v274
    %v282 = vsel %vm99, 0.0, %v271
    %v283 = vsel %vm104, 0.0, %v277
    %v284 = vsel %vm105, 0.0, %v280
    %285 = vrot.lane.b32.xlu0 %v265, 32
    %v286 = vpop.permute.xlu0 %285
    %287 = vrot.lane.b32.xlu0 %v266, 32
    %v288 = vpop.permute.xlu0 %287
    %293 = vrot.lane.b32.xlu0 %v283, 64
    %v294 = vpop.permute.xlu0 %293
    %295 = vrot.lane.b32.xlu0 %v284, 64
    %v296 = vpop.permute.xlu0 %295
    %v299 = vsel %vm122, %v281, %v286
    %v300 = vsel %vm122, %v282, %v288
    %v301 = vsel %vm125, %v299, %v294
    %v302 = vsel %vm125, %v300, %v296
    %v303 = vld [vmem:[#allocation5] sm:$0xff]
    %v304 = vld [vmem:[#allocation5 + $0x8] sm:$0xff]
    %v305 = vld [vmem:[#allocation5 + $0x10] sm:$0xff]
    %v306 = vld [vmem:[#allocation5 + $0x18] sm:$0xff]
    %v307 = vld [vmem:[#allocation5 + $0x20] sm:$0xff]
    %v308 = vld [vmem:[#allocation5 + $0x28] sm:$0xff]
    %v309 = vld [vmem:[#allocation5 + $0x30] sm:$0xff]
    %v310 = vld [vmem:[#allocation5 + $0x38] sm:$0xff]
    %v311 = vld [vmem:[#allocation5 + $0x40] sm:$0xff]
    %v312 = vld [vmem:[#allocation5 + $0x48] sm:$0xff]
    %v313 = vld [vmem:[#allocation5 + $0x50] sm:$0xff]
    %v314 = vld [vmem:[#allocation5 + $0x58] sm:$0xff]
    %v315 = vlaneseq
    %v316 = vshrl.u32 %v315, 7
    %v317 = vsub.s32 3, %v316
    %v318 = vrot.slane %v48, %v317
    %v320 = vsel %vm144, %v301, 0
    %v323 = vsel %vm144, %v302, 0
    %325 = vmatprep.subr.mxu0 0.0
    %326 = vmatpush1.msra.mxu0 0.0
    %327 = vmatprep.subr.mxu0 0.0
    %328 = vmatpush1.msra.mxu0 0.0
    %329 = vmatprep.subr.mxu0 0.0
    %330 = vmatpush1.msra.mxu0 0.0
    %331 = vmatprep.subr.mxu0 0.0
    %332 = vmatpush1.msra.mxu0 0.0
    %333 = vmatprep.subr.mxu0 0.0
    %334 = vmatpush1.msra.mxu0 %v314
    %335 = vmatprep.subr.mxu0 0.0
    %336 = vmatpush1.msra.mxu0 %v313
    %337 = vmatprep.subr.mxu0 0.0
    %338 = vmatpush1.msra.mxu0 %v312
    %339 = vmatprep.subr.mxu0 0.0
    %340 = vmatpush1.msra.mxu0 %v311
    %341 = vmatprep.subr.mxu0 0.0
    %342 = vmatpush1.msra.mxu0 %v310
    %343 = vmatprep.subr.mxu0 0.0
    %344 = vmatpush1.msra.mxu0 %v309
    %345 = vmatprep.subr.mxu0 0.0
    %346 = vmatpush1.msra.mxu0 %v308
    %347 = vmatprep.subr.mxu0 0.0
    %348 = vmatpush1.msra.mxu0 %v307
    %349 = vmatprep.subr.mxu0 0.0
    %350 = vmatpush1.msra.mxu0 %v306
    %351 = vmatprep.subr.mxu0 0.0
    %352 = vmatpush1.msra.mxu0 %v305
    %353 = vmatprep.subr.mxu0 0.0
    %354 = vmatpush1.msra.mxu0 %v304
    %355 = vmatprep.subr.mxu0 0.0
    %356 = vmatpush1.msra.mxu0 %v303
    %357 = vmatprep.subr.mxu0 0.0
    %358 = vmatpush2.msra.mxu0 0.0
    %359 = vmatprep.subr.mxu0 0.0
    %360 = vmatpush2.msra.mxu0 0.0
    %361 = vmatprep.subr.mxu0 0.0
    %362 = vmatpush2.msra.mxu0 0.0
    %363 = vmatprep.subr.mxu0 0.0
    %364 = vmatpush2.msra.mxu0 0.0
    %365 = vmatprep.subr.mxu0 0.0
    %366 = vmatpush2.msra.mxu0 0.0
    %367 = vmatprep.subr.mxu0 0.0
    %368 = vmatpush2.msra.mxu0 0.0
    %369 = vmatprep.subr.mxu0 0.0
    %370 = vmatpush2.msra.mxu0 0.0
    %371 = vmatprep.subr.mxu0 0.0
    %372 = vmatpush2.msra.mxu0 0.0
    %373 = vmatprep.subr.mxu0 0.0
    %374 = vmatpush2.msra.mxu0 0.0
    %375 = vmatprep.subr.mxu0 0.0
    %376 = vmatpush2.msra.mxu0 0.0
    %377 = vmatprep.subr.mxu0 0.0
    %378 = vmatpush2.msra.mxu0 0.0
    %379 = vmatprep.subr.mxu0 0.0
    %380 = vmatpush2.msra.mxu0 0.0
    %381 = vmatprep.subr.mxu0 0.0
    %382 = vmatpush2.msra.mxu0 0.0
    %383 = vmatprep.subr.mxu0 0.0
    %384 = vmatpush2.msra.mxu0 0.0
    %385 = vmatprep.subr.mxu0 0.0
    %386 = vmatpush2.msra.mxu0 0.0
    %387 = vmatprep.subr.mxu0 0.0
    %388 = vmatpush2.msra.mxu0 0.0
    %389 = vmatprep.mubr.f32.mxu0 0.0
    %390 = vmatmul.mubr.f32.gmra.mxu0 %v320
    %v391 = vpop.f32.mrf.mxu0
    %v392 = vadd.f32 %v318, %v391
    %v393 = vpop.f32.mrf.mxu0
    %394 = vmatprep.mubr.f32.mxu0 0.0
    %395 = vmatmul.mubr.f32.gmra.mxu0 %v323
    %v396 = vpop.f32.mrf.mxu0
    %v397 = vadd.f32 %v318, %v396
    %v398 = vpop.f32.mrf.mxu0
    %399 = vdwg.mxu0
    %v400 = vsel %vm122, %v392, 0.0
    %401 = vadd.xlane.f32.xlu0 %v400
    %v402 = vpop.xlane.xlu0 %401
    %v403 = vsel %vm122, %v397, 0.0
    %404 = vadd.xlane.f32.xlu0 %v403
    %v405 = vpop.xlane.xlu0 %404
    %v406 = vmul.f32 %v402, %v232
    %v407 = vmul.f32 %v405, %v232
    %v408 = vsub.f32 %v392, %v406
    %v409 = vsub.f32 %v397, %v407
    %v410 = vmul.f32 %v408, %v408
    %v411 = vmul.f32 %v409, %v409
    %v412 = vsel %vm122, %v410, 0.0
    %413 = vadd.xlane.f32.xlu0 %v412
    %v414 = vpop.xlane.xlu0 %413
    %v415 = vsel %vm122, %v411, 0.0
    %416 = vadd.xlane.f32.xlu0 %v415
    %v417 = vpop.xlane.xlu0 %416
    %v418 = vmul.f32 %v414, %v232
    %v419 = vmul.f32 %v417, %v232
    %v420 = vadd.f32 %v418, 1e-05
    %v421 = vadd.f32 %v419, 1e-05
    %v422 = vrsqrt.pop %v420
    %v423 = vrsqrt.pop %v421
    %v424 = vmul.f32 %v408, %v422
    %v425 = vmul.f32 %v409, %v423
    %v426 = vlaneseq
    %v427 = vshrl.u32 %v426, 7
    %v428 = vsub.s32 4, %v427
    %v429 = vrot.slane %v48, %v428
    %v430 = vmul.f32 %v424, %v429
    %v431 = vmul.f32 %v425, %v429
    %v432 = vlaneseq
    %v433 = vshrl.u32 %v432, 7
    %v434 = vsub.s32 5, %v433
    %v435 = vrot.slane %v48, %v434
    %v436 = vadd.f32 %v430, %v435
    %v437 = vadd.f32 %v431, %v435
    %v438 = vmax.f32 %v436, 0.0
    %v439 = vmax.f32 %v437, 0.0
    %v440 = vlaneseq
    %v441 = vshrl.u32 %v440, 7
    %v442 = vsub.s32 6, %v441
    %v443 = vrot.slane %v48, %v442
    %v444 = vmul.f32 %v438, %v443
    %v445 = vmul.f32 %v439, %v443
    %v446 = vsel %vm122, %v444, 0.0
    %447 = vadd.xlane.f32.xlu0 %v446
    %v448 = vpop.xlane.xlu0 %447
    %v449 = vsel %vm122, %v445, 0.0
    %450 = vadd.xlane.f32.xlu0 %v449
    %v451 = vpop.xlane.xlu0 %450
    %v453 = vrot.slane %v48, 7
    %s454 = vtos %v453
    %v455 = vstv %s454
    %v457 = vadd.f32 %v448, %v455
    %v458 = vadd.f32 %v451, %v455
    %v461 = vlaneseq
    %v462 = vand.u32 %v461, 127
    %v463 = vlaneseq
    %v464 = vshrl.u32 %v463, 7
    %v465 = vsub.s32 %v462, %v464
    %v466 = vrot.slane %v457, %v465
    %v467 = vlaneseq
    %v468 = vshrl.u32 %v467, 7
    %v469 = vsub.s32 %v462, %v468
    %v470 = vrot.slane %v458, %v469
    %vm471 = vcmask 1041409
    %v472 = vsel %vm471, %v470, %v466
    %vm474 = vcmask 58368
    %475 = vst.msk [vmem:[#allocation7] sm:$0x3] %vm474, %v472
    // Predicated region
    $region26: #{base_feature_predictor.1} parent=1 // pred_check
      _
    $region27: #{base_feature_predictor.1} parent=1 // pred_check_branch
      %477 = sbr.rel (0) target = $region29
    $region28: #{base_feature_predictor.1} parent=1 // pred_region
      %s479 = ssub.s32 32, 32
      %480 = vsyncadd [#allocation4], %s479
      %s482 = sshll.u32 [#allocation7], 4
      %s483 = int_to_ptr.vmem [resolvable:$true] %s482
      %485 = dma.vmem_to_hbm [thread:$0]  %s483, 32, %s4, [#allocation4]
    $region29: #{base_feature_predictor.1} parent=1 // pred_fallthru
      _
    // Predicated region
    $region30: #{base_feature_predictor.1} parent=1 // pred_check
      _
    $region31: #{base_feature_predictor.1} parent=1 // pred_check_branch
      %487 = sbr.rel (0) target = $region33
    $region32: #{base_feature_predictor.1} parent=1 // pred_region
      %488 = dma.done [#allocation4], 32
    $region33: #{base_feature_predictor.1} parent=1 // pred_fallthru
      _
    %489 = vsyncpa [#allocation3], 1
    %490 = vsyncpa [#allocation6], 1
    %491 = vsyncpa [#allocation4], 1

</llo_original>
